<compile_context>
chip_gen: v5e
topology: v5e:2x2
jax: 0.10.0
libtpu: 0.0.40
codegen_flags: <defaults>
</compile_context>

<pallas_src>
import jax
import jax.numpy as jnp
from jax import lax
from jax.experimental import pallas as pl
from jax.experimental.pallas import tpu as pltpu

# ---------------- config (small, consistent with the module) ----------------
VOCAB = 50          # vocab_size
EMBED = 32          # embed_dim
NUM_CLASS = 4       # num_class
NUM_BAGS = 2        # batch size (number of offsets)
NUM_TOKENS = 8      # total flattened tokens in `text`

_VMEM = pl.BlockSpec(memory_space=pltpu.MemorySpace.VMEM)


# ------------------------------ Pallas kernel --------------------------------
def text_sentiment_kernel(ids_ref, starts_ref, ends_ref, table_ref,
                          w_ref, b_ref, o_ref):
    """Fused EmbeddingBag(mean) + Linear.

    ids_ref:    [T, 1] int32   flattened token ids
    starts_ref: [B, 1] int32   bag start offsets
    ends_ref:   [B, 1] int32   bag end offsets (exclusive)
    table_ref:  [V, E] f32     embedding weight
    w_ref:      [E, C] f32     fc weight (pre-transposed)
    b_ref:      [1, C] f32     fc bias
    o_ref:      [B, C] f32     logits
    """
    T = ids_ref.shape[0]
    B = starts_ref.shape[0]
    V = table_ref.shape[0]

    # --- embedding lookup as a one-hot MXU matmul: [T, V] @ [V, E] -> [T, E]
    vocab_iota = lax.broadcasted_iota(jnp.int32, (T, V), 1)
    onehot = (ids_ref[...] == vocab_iota).astype(jnp.float32)
    tok_emb = jnp.dot(onehot, table_ref[...],
                      preferred_element_type=jnp.float32)

    # --- per-bag mean pooling matrix: [B, T], row b = mask_b / count_b
    t_iota = lax.broadcasted_iota(jnp.int32, (B, T), 1)
    starts = starts_ref[...]                                   # [B, 1]
    ends = ends_ref[...]                                       # [B, 1]
    mask = jnp.logical_and(t_iota >= starts,
                           t_iota < ends).astype(jnp.float32)  # [B, T]
    counts = jnp.maximum(ends - starts, 1).astype(jnp.float32)  # [B, 1]
    pool = mask / counts                                        # empty bag -> all-zero row

    hidden = jnp.dot(pool, tok_emb,
                     preferred_element_type=jnp.float32)        # [B, E]

    # --- fused Linear head
    o_ref[...] = (jnp.dot(hidden, w_ref[...],
                          preferred_element_type=jnp.float32) + b_ref[...])


# ------------------------------ wrapper ---------------------------------------
def text_sentiment_forward(params, text, offsets):
    """text: [T] int token ids, offsets: [B] int bag start offsets."""
    T = text.shape[0]
    B = offsets.shape[0]

    # tiny index bookkeeping (scalar arrays only); everything heavy is fused.
    ids2d = text.astype(jnp.int32).reshape(T, 1)
    starts = offsets.astype(jnp.int32).reshape(B, 1)
    ends = jnp.concatenate(
        [offsets[1:].astype(jnp.int32),
         jnp.array([T], dtype=jnp.int32)]).reshape(B, 1)

    return pl.pallas_call(
        text_sentiment_kernel,
        out_shape=jax.ShapeDtypeStruct((B, NUM_CLASS), jnp.float32),
        in_specs=[_VMEM, _VMEM, _VMEM, _VMEM, _VMEM, _VMEM],
        out_specs=_VMEM,
    )(ids2d, starts, ends,
      params["embed_w"], params["fc_w_t"], params["fc_b"])


# ------------------------------ parameters ------------------------------------
def init_params(key):
    """Mirror TextSentiment.init_weights(): U(-0.5, 0.5) weights, zero bias."""
    initrange = 0.5
    k_emb, k_fc = jax.random.split(key)
    embed_w = jax.random.uniform(k_emb, (VOCAB, EMBED), jnp.float32,
                                 -initrange, initrange)
    fc_w = jax.random.uniform(k_fc, (NUM_CLASS, EMBED), jnp.float32,
                              -initrange, initrange)
    return {
        "embed_w": embed_w,
        "fc_w_t": fc_w.T,                                  # [E, C]
        "fc_b": jnp.zeros((1, NUM_CLASS), jnp.float32),    # zero-initialized
    }


# ----------------------------------- main --------------------------------------
if __name__ == "__main__":
    key = jax.random.PRNGKey(0)
    pkey, tkey = jax.random.split(key)
    params = init_params(pkey)

    # flattened token ids + bag offsets (2 bags: tokens [0:5) and [5:8))
    text = jax.random.randint(tkey, (NUM_TOKENS,), 0, VOCAB, dtype=jnp.int32)
    offsets = jnp.array([0, 5], dtype=jnp.int32)

    out = text_sentiment_forward(params, text, offsets)
    out = jax.block_until_ready(out)
    assert out.shape == (NUM_BAGS, NUM_CLASS)
    assert bool(jnp.all(jnp.isfinite(out)))
    print("KERNEL_OK")
</pallas_src>

<mosaic_0001>
module attributes {stable_mosaic.version = 11 : i64} {
  func.func @text_sentiment_kernel(%arg0: memref<8x1xi32, #tpu.memory_space<vmem>>, %arg1: memref<2x1xi32, #tpu.memory_space<vmem>>, %arg2: memref<2x1xi32, #tpu.memory_space<vmem>>, %arg3: memref<50x32xf32, #tpu.memory_space<vmem>>, %arg4: memref<32x4xf32, #tpu.memory_space<vmem>>, %arg5: memref<1x4xf32, #tpu.memory_space<vmem>>, %arg6: memref<2x4xf32, #tpu.memory_space<vmem>>) attributes {dimension_semantics = [], scalar_prefetch = 0 : i64, scratch_operands = 0 : i64, tpu.core_type = #tpu.core_type<tc>} {
    %0 = tpu.iota {dimensions = array<i32: 1>} : vector<8x50xi32>
    %c0 = arith.constant 0 : index
    %c0_0 = arith.constant 0 : index
    %1 = vector.load %arg0[%c0, %c0_0] : memref<8x1xi32, #tpu.memory_space<vmem>>, vector<8x1xi32>
    %2 = vector.broadcast %1 : vector<8x1xi32> to vector<8x50xi32>
    %3 = arith.cmpi eq, %2, %0 : vector<8x50xi32>
    %4 = arith.extui %3 : vector<8x50xi1> to vector<8x50xi32>
    %5 = arith.sitofp %4 : vector<8x50xi32> to vector<8x50xf32>
    %c0_1 = arith.constant 0 : index
    %c0_2 = arith.constant 0 : index
    %6 = vector.load %arg3[%c0_1, %c0_2] : memref<50x32xf32, #tpu.memory_space<vmem>>, vector<50x32xf32>
    %cst = arith.constant dense<0.000000e+00> : vector<8x32xf32>
    %7 = tpu.matmul %5, %6, %cst {dimension_numbers = #tpu.dot_dimension_numbers<[1], [0], [0], [1], [0, 0, 1, 1], [], []>} : vector<8x50xf32>, vector<50x32xf32>, vector<8x32xf32> -> vector<8x32xf32>
    %8 = tpu.iota {dimensions = array<i32: 1>} : vector<2x8xi32>
    %c0_3 = arith.constant 0 : index
    %c0_4 = arith.constant 0 : index
    %9 = vector.load %arg1[%c0_3, %c0_4] : memref<2x1xi32, #tpu.memory_space<vmem>>, vector<2x1xi32>
    %c0_5 = arith.constant 0 : index
    %c0_6 = arith.constant 0 : index
    %10 = vector.load %arg2[%c0_5, %c0_6] : memref<2x1xi32, #tpu.memory_space<vmem>>, vector<2x1xi32>
    %11 = vector.broadcast %9 : vector<2x1xi32> to vector<2x8xi32>
    %12 = arith.cmpi sge, %8, %11 : vector<2x8xi32>
    %13 = vector.broadcast %10 : vector<2x1xi32> to vector<2x8xi32>
    %14 = arith.cmpi slt, %8, %13 : vector<2x8xi32>
    %15 = arith.andi %12, %14 : vector<2x8xi1>
    %16 = arith.extui %15 : vector<2x8xi1> to vector<2x8xi32>
    %17 = arith.sitofp %16 : vector<2x8xi32> to vector<2x8xf32>
    %18 = arith.subi %10, %9 : vector<2x1xi32>
    %c1_i32 = arith.constant 1 : i32
    %19 = vector.broadcast %c1_i32 : i32 to vector<2x1xi32>
    %20 = arith.maxsi %18, %19 : vector<2x1xi32>
    %21 = arith.sitofp %20 : vector<2x1xi32> to vector<2x1xf32>
    %22 = vector.broadcast %21 : vector<2x1xf32> to vector<2x8xf32>
    %23 = arith.divf %17, %22 : vector<2x8xf32>
    %cst_7 = arith.constant dense<0.000000e+00> : vector<2x32xf32>
    %24 = tpu.matmul %23, %7, %cst_7 {dimension_numbers = #tpu.dot_dimension_numbers<[1], [0], [0], [1], [0, 0, 1, 1], [], []>} : vector<2x8xf32>, vector<8x32xf32>, vector<2x32xf32> -> vector<2x32xf32>
    %c0_8 = arith.constant 0 : index
    %c0_9 = arith.constant 0 : index
    %25 = vector.load %arg4[%c0_8, %c0_9] : memref<32x4xf32, #tpu.memory_space<vmem>>, vector<32x4xf32>
    %cst_10 = arith.constant dense<0.000000e+00> : vector<2x4xf32>
    %26 = tpu.matmul %24, %25, %cst_10 {dimension_numbers = #tpu.dot_dimension_numbers<[1], [0], [0], [1], [0, 0, 1, 1], [], []>} : vector<2x32xf32>, vector<32x4xf32>, vector<2x4xf32> -> vector<2x4xf32>
    %c0_11 = arith.constant 0 : index
    %c0_12 = arith.constant 0 : index
    %27 = vector.load %arg5[%c0_11, %c0_12] : memref<1x4xf32, #tpu.memory_space<vmem>>, vector<1x4xf32>
    %28 = vector.broadcast %27 : vector<1x4xf32> to vector<2x4xf32>
    %29 = arith.addf %26, %28 : vector<2x4xf32>
    %c0_13 = arith.constant 0 : index
    %c0_14 = arith.constant 0 : index
    %30 = vector.load %arg6[%c0_13, %c0_14] : memref<2x4xf32, #tpu.memory_space<vmem>>, vector<2x4xf32>
    tpu.vector_store %arg6[%c0_13, %c0_14], %29 {strides = array<i32>} : memref<2x4xf32, #tpu.memory_space<vmem>>, vector<2x4xf32>,
    return
  }
}

</mosaic_0001>

<llo_original>
// kernel: tpu_custom_call.1
$region0: #{tpu_custom_call.1}
  #allocation0 [shape = 'u32[]', space=smem, size = 0x4, offset = 0x4, fixed_abs, tag = 'smem constant byte address 0x4 - core index']
  #allocation1 [shape = 'u32[72,128]{1,0:T(1,128)}', space=vmem, size = 0x9000, scoped, tag = 'internal scratch']
  %s0 = inlined_call_operand.vmem [shape: s32[8,1], index: 0, kind: input, shape index: {}]
  %s1 = inlined_call_operand.vmem [shape: s32[2,1], index: 1, kind: input, shape index: {}]
  %s2 = inlined_call_operand.vmem [shape: s32[2,1], index: 2, kind: input, shape index: {}]
  %s3 = inlined_call_operand.vmem [shape: f32[50,32], index: 3, kind: input, shape index: {}]
  %s4 = inlined_call_operand.vmem [shape: f32[32,4], index: 4, kind: input, shape index: {}]
  %s5 = inlined_call_operand.vmem [shape: f32[1,4], index: 5, kind: input, shape index: {}]
  %s6 = inlined_call_operand.hbm [shape: f32[2,4], index: 6, kind: output, shape index: {}]
  %s7 = sld [smem:[#allocation0]]
  $region34: #{tpu_custom_call.1} parent=0
    _
  %s9 = ssub.s32 1, %s7
  %s10 = scalar_select 0, %s9, %s7
  $region1: #{tpu_custom_call.1} parent=0
    #allocation2 [shape = 'u8[1024]{0}', space=vmem, size = 0x400, scoped, tag = 'output window, operand 0, single buffered']
    #allocation3 [shape = 's32[1]{0}', space=sflag, size = 0x4, scoped, tag = 'scoped memory for tpu_custom_call.1']
    %11 = vsyncpa [#allocation3], 0
    // Predicated region
    $region2: #{tpu_custom_call.1} parent=1 // pred_check
      _
    $region3: #{tpu_custom_call.1} parent=1 // pred_check_branch
      %13 = sbr.rel (0) target = $region5
    $region4: #{tpu_custom_call.1} parent=1 // pred_region
      _
    $region5: #{tpu_custom_call.1} parent=1 // pred_fallthru
      _
    // Predicated region
    $region6: #{tpu_custom_call.1} parent=1 // pred_check
      _
    $region7: #{tpu_custom_call.1} parent=1 // pred_check_branch
      %15 = sbr.rel (0) target = $region9
    $region8: #{tpu_custom_call.1} parent=1 // pred_region
      _
    $region9: #{tpu_custom_call.1} parent=1 // pred_fallthru
      _
    // Predicated region
    $region10: #{tpu_custom_call.1} parent=1 // pred_check
      _
    $region11: #{tpu_custom_call.1} parent=1 // pred_check_branch
      %17 = sbr.rel (0) target = $region13
    $region12: #{tpu_custom_call.1} parent=1 // pred_region
      _
    $region13: #{tpu_custom_call.1} parent=1 // pred_fallthru
      _
    // Predicated region
    $region14: #{tpu_custom_call.1} parent=1 // pred_check
      _
    $region15: #{tpu_custom_call.1} parent=1 // pred_check_branch
      %19 = sbr.rel (0) target = $region17
    $region16: #{tpu_custom_call.1} parent=1 // pred_region
      _
    $region17: #{tpu_custom_call.1} parent=1 // pred_fallthru
      _
    // Predicated region
    $region18: #{tpu_custom_call.1} parent=1 // pred_check
      _
    $region19: #{tpu_custom_call.1} parent=1 // pred_check_branch
      %21 = sbr.rel (0) target = $region21
    $region20: #{tpu_custom_call.1} parent=1 // pred_region
      _
    $region21: #{tpu_custom_call.1} parent=1 // pred_fallthru
      _
    // Predicated region
    $region22: #{tpu_custom_call.1} parent=1 // pred_check
      _
    $region23: #{tpu_custom_call.1} parent=1 // pred_check_branch
      %23 = sbr.rel (0) target = $region25
    $region24: #{tpu_custom_call.1} parent=1 // pred_region
      _
    $region25: #{tpu_custom_call.1} parent=1 // pred_fallthru
      _
    %v24 = vlaneseq
    %v25 = vand.u32 %v24, 127
    %v26 = vld [vmem:[%s0] sm:$0xff]
    %27 = vset.pattern.permute.xlu0 0
    %28 = vperm.xlu0 %27, %v26
    %v29 = vpop.permute.xlu0 %28
    %vm30 = vcmp.eq.s32.totalorder %v29, %v25
    %v31 = vsel %vm30, 1, 0
    %v32 = vcvt.s32.f32 %v31
    %v33 = vld [vmem:[%s3] sm:$0xff]
    %v34 = vld [vmem:[%s3 + $0x8] sm:$0xff]
    %v35 = vld [vmem:[%s3 + $0x10] sm:$0xff]
    %v36 = vld [vmem:[%s3 + $0x18] sm:$0xff]
    %v37 = vld [vmem:[%s3 + $0x20] sm:$0xff]
    %v38 = vld [vmem:[%s3 + $0x28] sm:$0xff]
    %v39 = vld [vmem:[%s3 + $0x30] sm:$0x3]
    %vm40 = vcmask 408576
    %v42 = vsel %vm40, %v32, 0
    %vm44 = vcmask 1041408
    %v46 = vsel %vm44, %v39, 0
    %48 = vmatpush.msra.mxu0 0.0
    %49 = vmatpush.msra.mxu0 0.0
    %50 = vmatpush.msra.mxu0 0.0
    %51 = vmatpush.msra.mxu0 0.0
    %52 = vmatpush.msra.mxu0 0.0
    %53 = vmatpush.msra.mxu0 0.0
    %54 = vmatpush.msra.mxu0 0.0
    %55 = vmatpush.msra.mxu0 0.0
    %56 = vmatpush.msra.mxu0 0.0
    %57 = vmatpush.msra.mxu0 %v46
    %58 = vmatpush.msra.mxu0 %v38
    %59 = vmatpush.msra.mxu0 %v37
    %60 = vmatpush.msra.mxu0 %v36
    %61 = vmatpush.msra.mxu0 %v35
    %62 = vmatpush.msra.mxu0 %v34
    %63 = vmatpush.msra.mxu0 %v33
    %64 = vmatmul.f32.gmra.mxu0 %v42
    %v65 = vpop.f32.mrf.mxu0
    %v66 = vadd.f32 0.0, %v65
    %67 = vdwg.mxu0
    %v68 = vld [vmem:[%s1] sm:$0x3]
    %v69 = vld [vmem:[%s2] sm:$0x3]
    %70 = vset.pattern.permute.xlu0 0
    %71 = vperm.xlu0 %70, %v68
    %v72 = vpop.permute.xlu0 %71
    %vm73 = vcmp.ge.s32.totalorder %v25, %v72
    %74 = vset.pattern.permute.xlu0 0
    %75 = vperm.xlu0 %74, %v69
    %v76 = vpop.permute.xlu0 %75
    %vm77 = vcmp.lt.s32.totalorder %v25, %v76
    %vm78 = vmand %vm73, %vm77
    %v79 = vsel %vm78, 1, 0
    %v80 = vcvt.s32.f32 %v79
    %v81 = vsub.s32 %v69, %v68
    %vm82 = vcmp.gt.s32.totalorder %v81, 1
    %v83 = vsel %vm82, %v81, 1
    %v84 = vcvt.s32.f32 %v83
    %86 = vset.pattern.permute.xlu0 0
    %87 = vperm.xlu0 %86, %v84
    %v88 = vpop.permute.xlu0 %87
    %v90 = vrcp.pop %v88
    %v91 = vmul.f32 %v88, %v90
    %v92 = vsub.f32 1.0, %v91
    %v93 = vmul.f32 %v90, %v92
    %v94 = vadd.f32 %v90, %v93
    %vm95 = vweird.f32 %v88
    %vm96 = vweird.f32 %v90
    %vm97 = vmor %vm95, %vm96
    %v98 = vsel %vm97, %v90, %v94
    %v99 = vand.u32 2147483647, %v88
    %vm100 = vcmp.eq.f32.partialorder %v99, 8.507059e+37
    %v101 = vand.u32 %v88, 2147483648
    %v102 = vor.u32 1.1754944e-38, %v101
    %v103 = vsel %vm100, %v102, %v98
    %v104 = vmul.f32 %v80, %v103
    %vm105 = vcmask 64512
    %v107 = vsel %vm105, %v104, 0
    %109 = vmatpush.msra.mxu0 0.0
    %110 = vmatpush.msra.mxu0 0.0
    %111 = vmatpush.msra.mxu0 0.0
    %112 = vmatpush.msra.mxu0 0.0
    %113 = vmatpush.msra.mxu0 0.0
    %114 = vmatpush.msra.mxu0 0.0
    %115 = vmatpush.msra.mxu0 0.0
    %116 = vmatpush.msra.mxu0 0.0
    %117 = vmatpush.msra.mxu0 0.0
    %118 = vmatpush.msra.mxu0 0.0
    %119 = vmatpush.msra.mxu0 0.0
    %120 = vmatpush.msra.mxu0 0.0
    %121 = vmatpush.msra.mxu0 0.0
    %122 = vmatpush.msra.mxu0 0.0
    %123 = vmatpush.msra.mxu0 0.0
    %124 = vmatpush.msra.mxu0 %v66
    %125 = vmatmul.f32.gmra.mxu0 %v107
    %v126 = vpop.f32.mrf.mxu0
    %v127 = vadd.f32 0.0, %v126
    %128 = vdwg.mxu0
    %v129 = vld [vmem:[%s4] sm:$0xff]
    %v130 = vld [vmem:[%s4 + $0x8] sm:$0xff]
    %v131 = vld [vmem:[%s4 + $0x10] sm:$0xff]
    %v132 = vld [vmem:[%s4 + $0x18] sm:$0xff]
    %v133 = vld [vmem:[%s5] sm:$0x1]
    %v135 = vperm.slane %v133, 0
    %vm137 = vcmask 261120
    %v139 = vsel %vm137, %v127, 0
    %141 = vmatpush.msra.mxu0 0.0
    %142 = vmatpush.msra.mxu0 0.0
    %143 = vmatpush.msra.mxu0 0.0
    %144 = vmatpush.msra.mxu0 0.0
    %145 = vmatpush.msra.mxu0 0.0
    %146 = vmatpush.msra.mxu0 0.0
    %147 = vmatpush.msra.mxu0 0.0
    %148 = vmatpush.msra.mxu0 0.0
    %149 = vmatpush.msra.mxu0 0.0
    %150 = vmatpush.msra.mxu0 0.0
    %151 = vmatpush.msra.mxu0 0.0
    %152 = vmatpush.msra.mxu0 0.0
    %153 = vmatpush.msra.mxu0 %v132
    %154 = vmatpush.msra.mxu0 %v131
    %155 = vmatpush.msra.mxu0 %v130
    %156 = vmatpush.msra.mxu0 %v129
    %157 = vmatmul.f32.gmra.mxu0 %v139
    %v158 = vpop.f32.mrf.mxu0
    %v159 = vadd.f32 %v135, %v158
    %160 = vdwg.mxu0
    %vm161 = vcmask 25600
    %162 = vst.msk [vmem:[#allocation2] sm:$0x3] %vm161, %v159
    // Predicated region
    $region26: #{tpu_custom_call.1} parent=1 // pred_check
      _
    $region27: #{tpu_custom_call.1} parent=1 // pred_check_branch
      %164 = sbr.rel (0) target = $region29
    $region28: #{tpu_custom_call.1} parent=1 // pred_region
      %166 = vsyncadd [#allocation3], 0
      %s168 = sshll.u32 [#allocation2], 4
      %s169 = int_to_ptr.vmem [resolvable:$true] %s168
      %s170 = sshll.u32 %s6, 4
      %s171 = int_to_ptr.hbm [resolvable:$true] %s170
      %173 = dma.vmem_to_hbm [thread:$0]  %s169, 32, %s171, [#allocation3]
    $region29: #{tpu_custom_call.1} parent=1 // pred_fallthru
      _
    // Predicated region
    $region30: #{tpu_custom_call.1} parent=1 // pred_check
      _
    $region31: #{tpu_custom_call.1} parent=1 // pred_check_branch
      %175 = sbr.rel (0) target = $region33
    $region32: #{tpu_custom_call.1} parent=1 // pred_region
      %177 = dma.done [#allocation3], 32
    $region33: #{tpu_custom_call.1} parent=1 // pred_fallthru
      _
    %178 = vsyncpa [#allocation3], 1

</llo_original>
